<compile_context>
chip_gen: v7x
topology: tpu7x:2x2x1
jax: 0.10.0
libtpu: 0.0.40
codegen_flags: <defaults>
</compile_context>

<pallas_src>
import jax
import jax.numpy as jnp
from jax.experimental import pallas as pl
from jax.experimental.pallas import tpu as pltpu


def _round_up(n, m):
    return ((n + m - 1) // m) * m


def _num_tensorcores():
    """Best-effort TensorCore-per-chip count (v7x: 2, v5e/v6e: 1)."""
    try:
        info = pltpu.get_tpu_info()
    except Exception:
        return 1
    for attr in ("num_cores", "core_count", "num_tensorcores", "tensorcore_count"):
        v = getattr(info, attr, None)
        if isinstance(v, int) and v > 0:
            return v
    return 1


def _hypernet_linear_kernel(x_ref, lat_ref, t_ref, s_ref, wf_ref, bwm_ref,
                            wbt_ref, bb_ref, o_ref):
    x = x_ref[...]        # (TN, I)
    lat = lat_ref[...]    # (TN, L)

    # Lane-dense expansion via constant 0/1 matmuls (rides the idle MXU):
    #   x_rep[n, l*I+k]   = x[n, k]
    #   lat_exp[n, l*I+k] = lat[n, l]
    x_rep = jnp.dot(x, t_ref[...], preferred_element_type=jnp.float32)      # (TN, L*I)
    lat_exp = jnp.dot(lat, s_ref[...], preferred_element_type=jnp.float32)  # (TN, L*I)
    kron = x_rep * lat_exp                                                  # one dense VPU mul

    out = jnp.dot(kron, wf_ref[...], preferred_element_type=jnp.float32)    # K = L*I
    out += jnp.dot(x, bwm_ref[...], preferred_element_type=jnp.float32)     # K = I
    out += jnp.dot(lat, wbt_ref[...], preferred_element_type=jnp.float32)   # K = L
    out += bb_ref[...]                                                      # (1, O) broadcast
    o_ref[...] = out.astype(o_ref.dtype)


def fold_hypernet_params(params):
    """Fold torch-convention HyperNetLinear params once (outside the per-call path).

    params = (ww, bw, wb, bb) with ww: (I*O, L), bw: (I*O,), wb: (O, L), bb: (O,).
    """
    ww, bw, wb, bb = params
    O, L = wb.shape
    I = ww.shape[0] // O

    # w_fold[l*I + k, o] = ww[k*O + o, l]
    w_fold = ww.reshape(I, O, L).transpose(2, 0, 1).reshape(L * I, O)
    bw_mat = bw.reshape(I, O)                  # bw_mat[k, o] = bw[k*O + o]
    wbt = wb.T                                 # (L, O)
    bb2 = bb.reshape(1, O)

    # Constant 0/1 lane-expansion matrices for the in-kernel Kronecker build.
    t_mat = jnp.tile(jnp.eye(I, dtype=ww.dtype), (1, L))         # (I, L*I)
    s_mat = jnp.repeat(jnp.eye(L, dtype=ww.dtype), I, axis=1)    # (L, L*I)
    return (t_mat, s_mat, w_fold, bw_mat, wbt, bb2)


def hypernet_linear(x, latent, folded_params, *, tile_n=1024):
    """Forward pass of HyperNetLinear using the pre-folded parameters."""
    t_mat, s_mat, w_fold, bw_mat, wbt, bb2 = folded_params
    I = x.shape[-1]
    L = latent.shape[-1]
    LI, O = w_fold.shape
    assert LI == L * I and t_mat.shape == (I, LI) and s_mat.shape == (L, LI)

    lead = x.shape[:-1]
    xf = x.reshape(-1, I)
    lf = latent.reshape(-1, L)
    N = xf.shape[0]
    if N == 0:
        return jnp.zeros((*lead, O), dtype=x.dtype)

    # ---- batch tile selection (no wrapper-side padding) --------------------
    assert tile_n % 8 == 0
    # Small batches get a single block equal to the full array dims (allowed
    # even when N is not 8-aligned); large batches use 8-aligned tiles and a
    # cdiv grid with a masked partial last block.
    tn = tile_n if N > tile_n else N
    # Only split the batch across TensorCores on multi-TC parts (v7x); on
    # single-TC chips the split just doubles per-step overhead.
    cores = _num_tensorcores()
    if cores > 1 and N > 256:
        tn = min(tn, _round_up(pl.cdiv(N, cores), 8))
    grid = (pl.cdiv(N, tn),)

    out = pl.pallas_call(
        _hypernet_linear_kernel,
        out_shape=jax.ShapeDtypeStruct((N, O), x.dtype),
        grid_spec=pltpu.PrefetchScalarGridSpec(
            num_scalar_prefetch=0,
            grid=grid,
            in_specs=[
                pl.BlockSpec((tn, I), lambda i: (i, 0)),     # x tile
                pl.BlockSpec((tn, L), lambda i: (i, 0)),     # latent tile
                pl.BlockSpec((I, LI), lambda i: (0, 0)),     # T (resident constant)
                pl.BlockSpec((L, LI), lambda i: (0, 0)),     # S (resident constant)
                pl.BlockSpec((LI, O), lambda i: (0, 0)),     # folded Ww (resident)
                pl.BlockSpec((I, O), lambda i: (0, 0)),      # bw reshaped to (I, O)
                pl.BlockSpec((L, O), lambda i: (0, 0)),      # Wb^T
                pl.BlockSpec((1, O), lambda i: (0, 0)),      # bb
            ],
            out_specs=pl.BlockSpec((tn, O), lambda i: (i, 0)),
        ),
        compiler_params=pltpu.CompilerParams(
            dimension_semantics=("parallel",)),
    )(xf, lf, t_mat, s_mat, w_fold, bw_mat, wbt, bb2)

    return out.reshape(*lead, O)


def hypernet_linear_ref(x, latent, params):
    """Pure-JAX reference reproducing the torch forward exactly."""
    I = x.shape[-1]
    ww, bw, wb, bb = params
    O = wb.shape[0]
    lead = x.shape[:-1]
    xf = x.reshape(-1, I)
    lf = latent.reshape(-1, latent.shape[-1])
    w = (lf @ ww.T + bw).reshape(-1, I, O)        # forward-hook reshape
    b = lf @ wb.T + bb                            # forward-hook unsqueeze(-2) (folded)
    out = jnp.einsum('ni,nio->no', xf, w) + b     # baddbmm(bias, x[:,None,:], w)
    return out.reshape(*lead, O)


if __name__ == "__main__":
    input_size, output_size, latent_size = 16, 32, 8

    key = jax.random.PRNGKey(0)
    k1, k2, k3, k4, kx, kl = jax.random.split(key, 6)

    # Deterministic synthetic init mimicking nn.Linear's U(-1/sqrt(fan_in), ...).
    bound = 1.0 / (latent_size ** 0.5)
    ww = jax.random.uniform(k1, (input_size * output_size, latent_size),
                            jnp.float32, -bound, bound)
    bw = jax.random.uniform(k2, (input_size * output_size,),
                            jnp.float32, -bound, bound)
    wb = jax.random.uniform(k3, (output_size, latent_size),
                            jnp.float32, -bound, bound)
    bb = jax.random.uniform(k4, (output_size,), jnp.float32, -bound, bound)
    params = (ww, bw, wb, bb)

    # Parameter fold hoisted out of the per-call path.
    folded = fold_hypernet_params(params)

    # Cases: aligned batch, ragged batch as a single full-dim block, ragged
    # batch with a masked partial last block, larger batch, and a multi-step
    # grid with a partial last block.
    cases = [((2, 8), 1024), ((3, 7), 1024), ((3, 7), 16),
             ((4, 160), 1024), ((4, 160), 256)]
    for shape, tile_n in cases:
        kx, sx = jax.random.split(kx)
        kl, sl = jax.random.split(kl)
        x = jax.random.normal(sx, (*shape, input_size), jnp.float32)
        latent = jax.random.normal(sl, (*shape, latent_size), jnp.float32)

        out = jax.block_until_ready(
            hypernet_linear(x, latent, folded, tile_n=tile_n))
        ref = hypernet_linear_ref(x, latent, params)
        assert out.shape == (*shape, output_size), out.shape
        assert jnp.allclose(out, ref, atol=1e-4, rtol=1e-4), \
            float(jnp.max(jnp.abs(out - ref)))

    print("KERNEL_OK")
</pallas_src>

<mosaic_0001>
module attributes {stable_mosaic.version = 11 : i64} {
  func.func @_hypernet_linear_kernel(%arg0: i32, %arg1: memref<16x16xf32, #tpu.memory_space<vmem>>, %arg2: memref<16x8xf32, #tpu.memory_space<vmem>>, %arg3: memref<16x128xf32, #tpu.memory_space<vmem>>, %arg4: memref<8x128xf32, #tpu.memory_space<vmem>>, %arg5: memref<128x32xf32, #tpu.memory_space<vmem>>, %arg6: memref<16x32xf32, #tpu.memory_space<vmem>>, %arg7: memref<8x32xf32, #tpu.memory_space<vmem>>, %arg8: memref<1x32xf32, #tpu.memory_space<vmem>>, %arg9: memref<16x32xf32, #tpu.memory_space<vmem>>) attributes {dimension_semantics = [#tpu.dimension_semantics<parallel>], iteration_bounds = array<i64: 1>, scalar_prefetch = 0 : i64, scratch_operands = 0 : i64, tpu.core_type = #tpu.core_type<tc>, window_params = [{transform_indices = @transform_0, window_bounds = array<i64: 16, 16>}, {transform_indices = @transform_1, window_bounds = array<i64: 16, 8>}, {pipeline_mode = #tpu.pipeline_mode<synchronous>, transform_indices = @transform_2, window_bounds = array<i64: 16, 128>}, {pipeline_mode = #tpu.pipeline_mode<synchronous>, transform_indices = @transform_3, window_bounds = array<i64: 8, 128>}, {pipeline_mode = #tpu.pipeline_mode<synchronous>, transform_indices = @transform_4, window_bounds = array<i64: 128, 32>}, {pipeline_mode = #tpu.pipeline_mode<synchronous>, transform_indices = @transform_5, window_bounds = array<i64: 16, 32>}, {pipeline_mode = #tpu.pipeline_mode<synchronous>, transform_indices = @transform_6, window_bounds = array<i64: 8, 32>}, {pipeline_mode = #tpu.pipeline_mode<synchronous>, transform_indices = @transform_7, window_bounds = array<i64: 1, 32>}, {transform_indices = @transform_8, window_bounds = array<i64: 16, 32>}]} {
    %c0 = arith.constant 0 : index
    %c0_0 = arith.constant 0 : index
    %0 = vector.load %arg1[%c0, %c0_0] : memref<16x16xf32, #tpu.memory_space<vmem>>, vector<16x16xf32>
    %c0_1 = arith.constant 0 : index
    %c0_2 = arith.constant 0 : index
    %1 = vector.load %arg2[%c0_1, %c0_2] : memref<16x8xf32, #tpu.memory_space<vmem>>, vector<16x8xf32>
    %c0_3 = arith.constant 0 : index
    %c0_4 = arith.constant 0 : index
    %2 = vector.load %arg3[%c0_3, %c0_4] : memref<16x128xf32, #tpu.memory_space<vmem>>, vector<16x128xf32>
    %cst = arith.constant dense<0.000000e+00> : vector<16x128xf32>
    %3 = tpu.matmul %0, %2, %cst {dimension_numbers = #tpu.dot_dimension_numbers<[1], [0], [0], [1], [0, 0, 1, 1], [], []>} : vector<16x16xf32>, vector<16x128xf32>, vector<16x128xf32> -> vector<16x128xf32>
    %c0_5 = arith.constant 0 : index
    %c0_6 = arith.constant 0 : index
    %4 = vector.load %arg4[%c0_5, %c0_6] : memref<8x128xf32, #tpu.memory_space<vmem>>, vector<8x128xf32>
    %cst_7 = arith.constant dense<0.000000e+00> : vector<16x128xf32>
    %5 = tpu.matmul %1, %4, %cst_7 {dimension_numbers = #tpu.dot_dimension_numbers<[1], [0], [0], [1], [0, 0, 1, 1], [], []>} : vector<16x8xf32>, vector<8x128xf32>, vector<16x128xf32> -> vector<16x128xf32>
    %6 = arith.mulf %3, %5 : vector<16x128xf32>
    %c0_8 = arith.constant 0 : index
    %c0_9 = arith.constant 0 : index
    %7 = vector.load %arg5[%c0_8, %c0_9] : memref<128x32xf32, #tpu.memory_space<vmem>>, vector<128x32xf32>
    %cst_10 = arith.constant dense<0.000000e+00> : vector<16x32xf32>
    %8 = tpu.matmul %6, %7, %cst_10 {dimension_numbers = #tpu.dot_dimension_numbers<[1], [0], [0], [1], [0, 0, 1, 1], [], []>} : vector<16x128xf32>, vector<128x32xf32>, vector<16x32xf32> -> vector<16x32xf32>
    %c0_11 = arith.constant 0 : index
    %c0_12 = arith.constant 0 : index
    %9 = vector.load %arg6[%c0_11, %c0_12] : memref<16x32xf32, #tpu.memory_space<vmem>>, vector<16x32xf32>
    %cst_13 = arith.constant dense<0.000000e+00> : vector<16x32xf32>
    %10 = tpu.matmul %0, %9, %cst_13 {dimension_numbers = #tpu.dot_dimension_numbers<[1], [0], [0], [1], [0, 0, 1, 1], [], []>} : vector<16x16xf32>, vector<16x32xf32>, vector<16x32xf32> -> vector<16x32xf32>
    %11 = arith.addf %8, %10 : vector<16x32xf32>
    %c0_14 = arith.constant 0 : index
    %c0_15 = arith.constant 0 : index
    %12 = vector.load %arg7[%c0_14, %c0_15] : memref<8x32xf32, #tpu.memory_space<vmem>>, vector<8x32xf32>
    %cst_16 = arith.constant dense<0.000000e+00> : vector<16x32xf32>
    %13 = tpu.matmul %1, %12, %cst_16 {dimension_numbers = #tpu.dot_dimension_numbers<[1], [0], [0], [1], [0, 0, 1, 1], [], []>} : vector<16x8xf32>, vector<8x32xf32>, vector<16x32xf32> -> vector<16x32xf32>
    %14 = arith.addf %11, %13 : vector<16x32xf32>
    %c0_17 = arith.constant 0 : index
    %c0_18 = arith.constant 0 : index
    %15 = vector.load %arg8[%c0_17, %c0_18] : memref<1x32xf32, #tpu.memory_space<vmem>>, vector<1x32xf32>
    %16 = vector.broadcast %15 : vector<1x32xf32> to vector<16x32xf32>
    %17 = arith.addf %14, %16 : vector<16x32xf32>
    %c0_19 = arith.constant 0 : index
    %c0_20 = arith.constant 0 : index
    %18 = vector.load %arg9[%c0_19, %c0_20] : memref<16x32xf32, #tpu.memory_space<vmem>>, vector<16x32xf32>
    tpu.vector_store %arg9[%c0_19, %c0_20], %17 {strides = array<i32>} : memref<16x32xf32, #tpu.memory_space<vmem>>, vector<16x32xf32>,
    return
  }
  func.func @transform_0(%arg0: i32) -> (i32, i32) {
    %c0_i32 = arith.constant 0 : i32
    %c0_i32_0 = arith.constant 0 : i32
    return %arg0, %c0_i32 : i32, i32
  }
  func.func @transform_1(%arg0: i32) -> (i32, i32) {
    %c0_i32 = arith.constant 0 : i32
    %c0_i32_0 = arith.constant 0 : i32
    return %arg0, %c0_i32 : i32, i32
  }
  func.func @transform_2(%arg0: i32) -> (i32, i32) {
    %c0_i32 = arith.constant 0 : i32
    %c0_i32_0 = arith.constant 0 : i32
    %c0_i32_1 = arith.constant 0 : i32
    return %c0_i32, %c0_i32_0 : i32, i32
  }
  func.func @transform_3(%arg0: i32) -> (i32, i32) {
    %c0_i32 = arith.constant 0 : i32
    %c0_i32_0 = arith.constant 0 : i32
    %c0_i32_1 = arith.constant 0 : i32
    return %c0_i32, %c0_i32_0 : i32, i32
  }
  func.func @transform_4(%arg0: i32) -> (i32, i32) {
    %c0_i32 = arith.constant 0 : i32
    %c0_i32_0 = arith.constant 0 : i32
    %c0_i32_1 = arith.constant 0 : i32
    return %c0_i32, %c0_i32_0 : i32, i32
  }
  func.func @transform_5(%arg0: i32) -> (i32, i32) {
    %c0_i32 = arith.constant 0 : i32
    %c0_i32_0 = arith.constant 0 : i32
    %c0_i32_1 = arith.constant 0 : i32
    return %c0_i32, %c0_i32_0 : i32, i32
  }
  func.func @transform_6(%arg0: i32) -> (i32, i32) {
    %c0_i32 = arith.constant 0 : i32
    %c0_i32_0 = arith.constant 0 : i32
    %c0_i32_1 = arith.constant 0 : i32
    return %c0_i32, %c0_i32_0 : i32, i32
  }
  func.func @transform_7(%arg0: i32) -> (i32, i32) {
    %c0_i32 = arith.constant 0 : i32
    %c0_i32_0 = arith.constant 0 : i32
    %c0_i32_1 = arith.constant 0 : i32
    return %c0_i32, %c0_i32_0 : i32, i32
  }
  func.func @transform_8(%arg0: i32) -> (i32, i32) {
    %c0_i32 = arith.constant 0 : i32
    %c0_i32_0 = arith.constant 0 : i32
    return %arg0, %c0_i32 : i32, i32
  }
}

</mosaic_0001>

<llo_original>
// kernel: tpu_custom_call.1
$region0: #{tpu_custom_call.1}
  #allocation0 [shape = 'u32[]', space=smem, size = 0x4, offset = 0x4, fixed_abs, tag = 'smem constant byte address 0x4 - core index']
  #allocation1 [shape = 'u32[144,128]{1,0:T(1,128)}', space=vmem, size = 0x12000, scoped, tag = 'internal scratch']
  %s0 = inlined_call_operand.vmem [shape: f32[16,16], index: 0, kind: input, shape index: {}]
  %s1 = inlined_call_operand.vmem [shape: f32[16,8], index: 1, kind: input, shape index: {}]
  %s2 = inlined_call_operand.vmem [shape: f32[16,128], index: 2, kind: input, shape index: {}]
  %s3 = inlined_call_operand.vmem [shape: f32[8,128], index: 3, kind: input, shape index: {}]
  %s4 = inlined_call_operand.vmem [shape: f32[128,32], index: 4, kind: input, shape index: {}]
  %s5 = inlined_call_operand.vmem [shape: f32[16,32], index: 5, kind: input, shape index: {}]
  %s6 = inlined_call_operand.vmem [shape: f32[8,32], index: 6, kind: input, shape index: {}]
  %s7 = inlined_call_operand.vmem [shape: f32[1,32], index: 7, kind: input, shape index: {}]
  %s8 = inlined_call_operand.hbm [shape: f32[16,32], index: 8, kind: output, shape index: {}]
  %s9 = sld [smem:[#allocation0]]
  $region42: #{tpu_custom_call.1} parent=0
    _
  %s11 = ssub.s32 1, %s9
  %s12 = scalar_select 0, %s11, %s9
  $region1: #{tpu_custom_call.1} parent=0
    #allocation2 [shape = 'u8[8192]{0}', space=vmem, size = 0x2000, scoped, tag = 'output window, operand 0, single buffered']
    #allocation3 [shape = 's32[1]{0}', space=sflag, size = 0x4, scoped, tag = 'scoped memory for tpu_custom_call.1']
    %13 = vsyncpa [#allocation3], 0
    // Predicated region
    $region2: #{tpu_custom_call.1} parent=1 // pred_check
      _
    $region3: #{tpu_custom_call.1} parent=1 // pred_check_branch
      %15 = sbr.rel (0) target = $region5
    $region4: #{tpu_custom_call.1} parent=1 // pred_region
      _
    $region5: #{tpu_custom_call.1} parent=1 // pred_fallthru
      _
    // Predicated region
    $region6: #{tpu_custom_call.1} parent=1 // pred_check
      _
    $region7: #{tpu_custom_call.1} parent=1 // pred_check_branch
      %17 = sbr.rel (0) target = $region9
    $region8: #{tpu_custom_call.1} parent=1 // pred_region
      _
    $region9: #{tpu_custom_call.1} parent=1 // pred_fallthru
      _
    // Predicated region
    $region10: #{tpu_custom_call.1} parent=1 // pred_check
      _
    $region11: #{tpu_custom_call.1} parent=1 // pred_check_branch
      %19 = sbr.rel (0) target = $region13
    $region12: #{tpu_custom_call.1} parent=1 // pred_region
      _
    $region13: #{tpu_custom_call.1} parent=1 // pred_fallthru
      _
    // Predicated region
    $region14: #{tpu_custom_call.1} parent=1 // pred_check
      _
    $region15: #{tpu_custom_call.1} parent=1 // pred_check_branch
      %21 = sbr.rel (0) target = $region17
    $region16: #{tpu_custom_call.1} parent=1 // pred_region
      _
    $region17: #{tpu_custom_call.1} parent=1 // pred_fallthru
      _
    // Predicated region
    $region18: #{tpu_custom_call.1} parent=1 // pred_check
      _
    $region19: #{tpu_custom_call.1} parent=1 // pred_check_branch
      %23 = sbr.rel (0) target = $region21
    $region20: #{tpu_custom_call.1} parent=1 // pred_region
      _
    $region21: #{tpu_custom_call.1} parent=1 // pred_fallthru
      _
    // Predicated region
    $region22: #{tpu_custom_call.1} parent=1 // pred_check
      _
    $region23: #{tpu_custom_call.1} parent=1 // pred_check_branch
      %25 = sbr.rel (0) target = $region25
    $region24: #{tpu_custom_call.1} parent=1 // pred_region
      _
    $region25: #{tpu_custom_call.1} parent=1 // pred_fallthru
      _
    // Predicated region
    $region26: #{tpu_custom_call.1} parent=1 // pred_check
      _
    $region27: #{tpu_custom_call.1} parent=1 // pred_check_branch
      %27 = sbr.rel (0) target = $region29
    $region28: #{tpu_custom_call.1} parent=1 // pred_region
      _
    $region29: #{tpu_custom_call.1} parent=1 // pred_fallthru
      _
    // Predicated region
    $region30: #{tpu_custom_call.1} parent=1 // pred_check
      _
    $region31: #{tpu_custom_call.1} parent=1 // pred_check_branch
      %29 = sbr.rel (0) target = $region33
    $region32: #{tpu_custom_call.1} parent=1 // pred_region
      _
    $region33: #{tpu_custom_call.1} parent=1 // pred_fallthru
      _
    %v30 = vld [vmem:[%s0] sm:$0xff]
    %v31 = vld [vmem:[%s0 + $0x8] sm:$0xff]
    %v32 = vld [vmem:[%s1] sm:$0xff]
    %v33 = vld [vmem:[%s1 + $0x8] sm:$0xff]
    %v34 = vld [vmem:[%s2] sm:$0xff]
    %v35 = vld [vmem:[%s2 + $0x8] sm:$0xff]
    %vm36 = vcmask 130048
    %v38 = vsel %vm36, %v30, 0
    %v41 = vsel %vm36, %v31, 0
    %43 = vmatprep.subr.mxu0 0.0
    %44 = vmatpush1.msra.mxu0 %v34
    %45 = vmatprep.subr.mxu0 0.0
    %46 = vmatpush1.msra.mxu0 %v35
    %47 = vmatprep.subr.mxu0 0.0
    %48 = vmatpush1.msra.mxu0 0.0
    %49 = vmatprep.subr.mxu0 0.0
    %50 = vmatpush1.msra.mxu0 0.0
    %51 = vmatprep.subr.mxu0 0.0
    %52 = vmatpush1.msra.mxu0 0.0
    %53 = vmatprep.subr.mxu0 0.0
    %54 = vmatpush1.msra.mxu0 0.0
    %55 = vmatprep.subr.mxu0 0.0
    %56 = vmatpush1.msra.mxu0 0.0
    %57 = vmatprep.subr.mxu0 0.0
    %58 = vmatpush1.msra.mxu0 0.0
    %59 = vmatprep.subr.mxu0 0.0
    %60 = vmatpush1.msra.mxu0 0.0
    %61 = vmatprep.subr.mxu0 0.0
    %62 = vmatpush1.msra.mxu0 0.0
    %63 = vmatprep.subr.mxu0 0.0
    %64 = vmatpush1.msra.mxu0 0.0
    %65 = vmatprep.subr.mxu0 0.0
    %66 = vmatpush1.msra.mxu0 0.0
    %67 = vmatprep.subr.mxu0 0.0
    %68 = vmatpush1.msra.mxu0 0.0
    %69 = vmatprep.subr.mxu0 0.0
    %70 = vmatpush1.msra.mxu0 0.0
    %71 = vmatprep.subr.mxu0 0.0
    %72 = vmatpush1.msra.mxu0 0.0
    %73 = vmatprep.subr.mxu0 0.0
    %74 = vmatpush1.msra.mxu0 0.0
    %75 = vmatprep.subr.mxu0 0.0
    %76 = vmatpush1.msra.mxu0 0.0
    %77 = vmatprep.subr.mxu0 0.0
    %78 = vmatpush1.msra.mxu0 0.0
    %79 = vmatprep.subr.mxu0 0.0
    %80 = vmatpush1.msra.mxu0 0.0
    %81 = vmatprep.subr.mxu0 0.0
    %82 = vmatpush1.msra.mxu0 0.0
    %83 = vmatprep.subr.mxu0 0.0
    %84 = vmatpush1.msra.mxu0 0.0
    %85 = vmatprep.subr.mxu0 0.0
    %86 = vmatpush1.msra.mxu0 0.0
    %87 = vmatprep.subr.mxu0 0.0
    %88 = vmatpush1.msra.mxu0 0.0
    %89 = vmatprep.subr.mxu0 0.0
    %90 = vmatpush1.msra.mxu0 0.0
    %91 = vmatprep.subr.mxu0 0.0
    %92 = vmatpush1.msra.mxu0 0.0
    %93 = vmatprep.subr.mxu0 0.0
    %94 = vmatpush1.msra.mxu0 0.0
    %95 = vmatprep.subr.mxu0 0.0
    %96 = vmatpush1.msra.mxu0 0.0
    %97 = vmatprep.subr.mxu0 0.0
    %98 = vmatpush1.msra.mxu0 0.0
    %99 = vmatprep.subr.mxu0 0.0
    %100 = vmatpush1.msra.mxu0 0.0
    %101 = vmatprep.subr.mxu0 0.0
    %102 = vmatpush1.msra.mxu0 0.0
    %103 = vmatprep.subr.mxu0 0.0
    %104 = vmatpush1.msra.mxu0 0.0
    %105 = vmatprep.subr.mxu0 0.0
    %106 = vmatpush1.msra.mxu0 0.0
    %107 = vmatprep.mubr.f32.mxu0 0.0
    %108 = vmatmul.mubr.f32.gmra.mrb[0].mxu0 %v38
    %v109 = vpop.f32.mrb[0].mxu0
    %v110 = vadd.f32 0.0, %v109
    %v111 = vpop.f32.mrb[0].mxu0
    %112 = vmatprep.mubr.f32.mxu0 0.0
    %113 = vmatmul.mubr.f32.gmra.mrb[0].mxu0 %v41
    %v114 = vpop.f32.mrb[0].mxu0
    %v115 = vadd.f32 0.0, %v114
    %v116 = vpop.f32.mrb[0].mxu0
    %117 = vdwg.mxu0
    %v118 = vld [vmem:[%s3] sm:$0xff]
    %vm119 = vcmask 64512
    %v121 = vsel %vm119, %v32, 0
    %v124 = vsel %vm119, %v33, 0
    %126 = vmatprep.subr.mxu0 0.0
    %127 = vmatpush1.msra.mxu0 %v118
    %128 = vmatprep.subr.mxu0 0.0
    %129 = vmatpush1.msra.mxu0 0.0
    %130 = vmatprep.subr.mxu0 0.0
    %131 = vmatpush1.msra.mxu0 0.0
    %132 = vmatprep.subr.mxu0 0.0
    %133 = vmatpush1.msra.mxu0 0.0
    %134 = vmatprep.subr.mxu0 0.0
    %135 = vmatpush1.msra.mxu0 0.0
    %136 = vmatprep.subr.mxu0 0.0
    %137 = vmatpush1.msra.mxu0 0.0
    %138 = vmatprep.subr.mxu0 0.0
    %139 = vmatpush1.msra.mxu0 0.0
    %140 = vmatprep.subr.mxu0 0.0
    %141 = vmatpush1.msra.mxu0 0.0
    %142 = vmatprep.subr.mxu0 0.0
    %143 = vmatpush1.msra.mxu0 0.0
    %144 = vmatprep.subr.mxu0 0.0
    %145 = vmatpush1.msra.mxu0 0.0
    %146 = vmatprep.subr.mxu0 0.0
    %147 = vmatpush1.msra.mxu0 0.0
    %148 = vmatprep.subr.mxu0 0.0
    %149 = vmatpush1.msra.mxu0 0.0
    %150 = vmatprep.subr.mxu0 0.0
    %151 = vmatpush1.msra.mxu0 0.0
    %152 = vmatprep.subr.mxu0 0.0
    %153 = vmatpush1.msra.mxu0 0.0
    %154 = vmatprep.subr.mxu0 0.0
    %155 = vmatpush1.msra.mxu0 0.0
    %156 = vmatprep.subr.mxu0 0.0
    %157 = vmatpush1.msra.mxu0 0.0
    %158 = vmatprep.subr.mxu0 0.0
    %159 = vmatpush1.msra.mxu0 0.0
    %160 = vmatprep.subr.mxu0 0.0
    %161 = vmatpush1.msra.mxu0 0.0
    %162 = vmatprep.subr.mxu0 0.0
    %163 = vmatpush1.msra.mxu0 0.0
    %164 = vmatprep.subr.mxu0 0.0
    %165 = vmatpush1.msra.mxu0 0.0
    %166 = vmatprep.subr.mxu0 0.0
    %167 = vmatpush1.msra.mxu0 0.0
    %168 = vmatprep.subr.mxu0 0.0
    %169 = vmatpush1.msra.mxu0 0.0
    %170 = vmatprep.subr.mxu0 0.0
    %171 = vmatpush1.msra.mxu0 0.0
    %172 = vmatprep.subr.mxu0 0.0
    %173 = vmatpush1.msra.mxu0 0.0
    %174 = vmatprep.subr.mxu0 0.0
    %175 = vmatpush1.msra.mxu0 0.0
    %176 = vmatprep.subr.mxu0 0.0
    %177 = vmatpush1.msra.mxu0 0.0
    %178 = vmatprep.subr.mxu0 0.0
    %179 = vmatpush1.msra.mxu0 0.0
    %180 = vmatprep.subr.mxu0 0.0
    %181 = vmatpush1.msra.mxu0 0.0
    %182 = vmatprep.subr.mxu0 0.0
    %183 = vmatpush1.msra.mxu0 0.0
    %184 = vmatprep.subr.mxu0 0.0
    %185 = vmatpush1.msra.mxu0 0.0
    %186 = vmatprep.subr.mxu0 0.0
    %187 = vmatpush1.msra.mxu0 0.0
    %188 = vmatprep.subr.mxu0 0.0
    %189 = vmatpush1.msra.mxu0 0.0
    %190 = vmatprep.mubr.f32.mxu0 0.0
    %191 = vmatmul.mubr.f32.gmra.mrb[0].mxu0 %v121
    %v192 = vpop.f32.mrb[0].mxu0
    %v193 = vadd.f32 0.0, %v192
    %v194 = vpop.f32.mrb[0].mxu0
    %195 = vmatprep.mubr.f32.mxu0 0.0
    %196 = vmatmul.mubr.f32.gmra.mrb[0].mxu0 %v124
    %v197 = vpop.f32.mrb[0].mxu0
    %v198 = vadd.f32 0.0, %v197
    %v199 = vpop.f32.mrb[0].mxu0
    %200 = vdwg.mxu0
    %v201 = vmul.f32 %v110, %v193
    %v202 = vmul.f32 %v115, %v198
    %v203 = vld [vmem:[%s4] sm:$0xff]
    %v204 = vld [vmem:[%s4 + $0x8] sm:$0xff]
    %v205 = vld [vmem:[%s4 + $0x10] sm:$0xff]
    %v206 = vld [vmem:[%s4 + $0x18] sm:$0xff]
    %v207 = vld [vmem:[%s4 + $0x20] sm:$0xff]
    %v208 = vld [vmem:[%s4 + $0x28] sm:$0xff]
    %v209 = vld [vmem:[%s4 + $0x30] sm:$0xff]
    %v210 = vld [vmem:[%s4 + $0x38] sm:$0xff]
    %v211 = vld [vmem:[%s4 + $0x40] sm:$0xff]
    %v212 = vld [vmem:[%s4 + $0x48] sm:$0xff]
    %v213 = vld [vmem:[%s4 + $0x50] sm:$0xff]
    %v214 = vld [vmem:[%s4 + $0x58] sm:$0xff]
    %v215 = vld [vmem:[%s4 + $0x60] sm:$0xff]
    %v216 = vld [vmem:[%s4 + $0x68] sm:$0xff]
    %v217 = vld [vmem:[%s4 + $0x70] sm:$0xff]
    %v218 = vld [vmem:[%s4 + $0x78] sm:$0xff]
    %v219 = vld [vmem:[%s5] sm:$0xff]
    %v220 = vld [vmem:[%s5 + $0x8] sm:$0xff]
    %221 = vmatprep.subr.mxu0 0.0
    %222 = vmatpush1.msra.mxu0 %v219
    %223 = vmatprep.subr.mxu0 0.0
    %224 = vmatpush1.msra.mxu0 %v220
    %225 = vmatprep.subr.mxu0 0.0
    %226 = vmatpush1.msra.mxu0 0.0
    %227 = vmatprep.subr.mxu0 0.0
    %228 = vmatpush1.msra.mxu0 0.0
    %229 = vmatprep.subr.mxu0 0.0
    %230 = vmatpush1.msra.mxu0 0.0
    %231 = vmatprep.subr.mxu0 0.0
    %232 = vmatpush1.msra.mxu0 0.0
    %233 = vmatprep.subr.mxu0 0.0
    %234 = vmatpush1.msra.mxu0 0.0
    %235 = vmatprep.subr.mxu0 0.0
    %236 = vmatpush1.msra.mxu0 0.0
    %237 = vmatprep.subr.mxu0 0.0
    %238 = vmatpush1.msra.mxu0 0.0
    %239 = vmatprep.subr.mxu0 0.0
    %240 = vmatpush1.msra.mxu0 0.0
    %241 = vmatprep.subr.mxu0 0.0
    %242 = vmatpush1.msra.mxu0 0.0
    %243 = vmatprep.subr.mxu0 0.0
    %244 = vmatpush1.msra.mxu0 0.0
    %245 = vmatprep.subr.mxu0 0.0
    %246 = vmatpush1.msra.mxu0 0.0
    %247 = vmatprep.subr.mxu0 0.0
    %248 = vmatpush1.msra.mxu0 0.0
    %249 = vmatprep.subr.mxu0 0.0
    %250 = vmatpush1.msra.mxu0 0.0
    %251 = vmatprep.subr.mxu0 0.0
    %252 = vmatpush1.msra.mxu0 0.0
    %253 = vmatprep.subr.mxu0 0.0
    %254 = vmatpush1.msra.mxu0 0.0
    %255 = vmatprep.subr.mxu0 0.0
    %256 = vmatpush1.msra.mxu0 0.0
    %257 = vmatprep.subr.mxu0 0.0
    %258 = vmatpush1.msra.mxu0 0.0
    %259 = vmatprep.subr.mxu0 0.0
    %260 = vmatpush1.msra.mxu0 0.0
    %261 = vmatprep.subr.mxu0 0.0
    %262 = vmatpush1.msra.mxu0 0.0
    %263 = vmatprep.subr.mxu0 0.0
    %264 = vmatpush1.msra.mxu0 0.0
    %265 = vmatprep.subr.mxu0 0.0
    %266 = vmatpush1.msra.mxu0 0.0
    %267 = vmatprep.subr.mxu0 0.0
    %268 = vmatpush1.msra.mxu0 0.0
    %269 = vmatprep.subr.mxu0 0.0
    %270 = vmatpush1.msra.mxu0 0.0
    %271 = vmatprep.subr.mxu0 0.0
    %272 = vmatpush1.msra.mxu0 0.0
    %273 = vmatprep.subr.mxu0 0.0
    %274 = vmatpush1.msra.mxu0 0.0
    %275 = vmatprep.subr.mxu0 0.0
    %276 = vmatpush1.msra.mxu0 0.0
    %277 = vmatprep.subr.mxu0 0.0
    %278 = vmatpush1.msra.mxu0 0.0
    %279 = vmatprep.subr.mxu0 0.0
    %280 = vmatpush1.msra.mxu0 0.0
    %281 = vmatprep.subr.mxu0 0.0
    %282 = vmatpush1.msra.mxu0 0.0
    %283 = vmatprep.subr.mxu0 0.0
    %284 = vmatpush1.msra.mxu0 0.0
    %285 = vmatprep.mubr.f32.mxu0 0.0
    %286 = vmatmul.mubr.f32.gmra.mrb[0].mxu0 %v38
    %v287 = vpop.f32.mrb[0].mxu0
    %v288 = vadd.f32 0.0, %v287
    %v289 = vpop.f32.mrb[0].mxu0
    %290 = vmatprep.mubr.f32.mxu0 0.0
    %291 = vmatmul.mubr.f32.gmra.mrb[0].mxu0 %v41
    %v292 = vpop.f32.mrb[0].mxu0
    %v293 = vadd.f32 0.0, %v292
    %v294 = vpop.f32.mrb[0].mxu0
    %295 = vdwg.mxu0
    %296 = vmatprep.subr.mxu0 0.0
    %297 = vmatpush1.msra.mxu0 %v203
    %298 = vmatprep.subr.mxu0 0.0
    %299 = vmatpush1.msra.mxu0 %v204
    %300 = vmatprep.subr.mxu0 0.0
    %301 = vmatpush1.msra.mxu0 %v205
    %302 = vmatprep.subr.mxu0 0.0
    %303 = vmatpush1.msra.mxu0 %v206
    %304 = vmatprep.subr.mxu0 0.0
    %305 = vmatpush1.msra.mxu0 %v207
    %306 = vmatprep.subr.mxu0 0.0
    %307 = vmatpush1.msra.mxu0 %v208
    %308 = vmatprep.subr.mxu0 0.0
    %309 = vmatpush1.msra.mxu0 %v209
    %310 = vmatprep.subr.mxu0 0.0
    %311 = vmatpush1.msra.mxu0 %v210
    %312 = vmatprep.subr.mxu0 0.0
    %313 = vmatpush1.msra.mxu0 %v211
    %314 = vmatprep.subr.mxu0 0.0
    %315 = vmatpush1.msra.mxu0 %v212
    %316 = vmatprep.subr.mxu0 0.0
    %317 = vmatpush1.msra.mxu0 %v213
    %318 = vmatprep.subr.mxu0 0.0
    %319 = vmatpush1.msra.mxu0 %v214
    %320 = vmatprep.subr.mxu0 0.0
    %321 = vmatpush1.msra.mxu0 %v215
    %322 = vmatprep.subr.mxu0 0.0
    %323 = vmatpush1.msra.mxu0 %v216
    %324 = vmatprep.subr.mxu0 0.0
    %325 = vmatpush1.msra.mxu0 %v217
    %326 = vmatprep.subr.mxu0 0.0
    %327 = vmatpush1.msra.mxu0 %v218
    %328 = vmatprep.subr.mxu0 0.0
    %329 = vmatpush1.msra.mxu0 0.0
    %330 = vmatprep.subr.mxu0 0.0
    %331 = vmatpush1.msra.mxu0 0.0
    %332 = vmatprep.subr.mxu0 0.0
    %333 = vmatpush1.msra.mxu0 0.0
    %334 = vmatprep.subr.mxu0 0.0
    %335 = vmatpush1.msra.mxu0 0.0
    %336 = vmatprep.subr.mxu0 0.0
    %337 = vmatpush1.msra.mxu0 0.0
    %338 = vmatprep.subr.mxu0 0.0
    %339 = vmatpush1.msra.mxu0 0.0
    %340 = vmatprep.subr.mxu0 0.0
    %341 = vmatpush1.msra.mxu0 0.0
    %342 = vmatprep.subr.mxu0 0.0
    %343 = vmatpush1.msra.mxu0 0.0
    %344 = vmatprep.subr.mxu0 0.0
    %345 = vmatpush1.msra.mxu0 0.0
    %346 = vmatprep.subr.mxu0 0.0
    %347 = vmatpush1.msra.mxu0 0.0
    %348 = vmatprep.subr.mxu0 0.0
    %349 = vmatpush1.msra.mxu0 0.0
    %350 = vmatprep.subr.mxu0 0.0
    %351 = vmatpush1.msra.mxu0 0.0
    %352 = vmatprep.subr.mxu0 0.0
    %353 = vmatpush1.msra.mxu0 0.0
    %354 = vmatprep.subr.mxu0 0.0
    %355 = vmatpush1.msra.mxu0 0.0
    %356 = vmatprep.subr.mxu0 0.0
    %357 = vmatpush1.msra.mxu0 0.0
    %358 = vmatprep.subr.mxu0 0.0
    %359 = vmatpush1.msra.mxu0 0.0
    %360 = vmatprep.mubr.f32.mxu0 0.0
    %361 = vmatmul.mubr.f32.gmra.mrb[0].mxu0 %v201
    %v362 = vpop.f32.mrb[0].mxu0
    %v363 = vadd.f32 %v288, %v362
    %v364 = vpop.f32.mrb[0].mxu0
    %365 = vmatprep.mubr.f32.mxu0 0.0
    %366 = vmatmul.mubr.f32.gmra.mrb[0].mxu0 %v202
    %v367 = vpop.f32.mrb[0].mxu0
    %v368 = vadd.f32 %v293, %v367
    %v369 = vpop.f32.mrb[0].mxu0
    %370 = vdwg.mxu0
    %v371 = vld [vmem:[%s6] sm:$0xff]
    %372 = vmatprep.subr.mxu0 0.0
    %373 = vmatpush1.msra.mxu0 %v371
    %374 = vmatprep.subr.mxu0 0.0
    %375 = vmatpush1.msra.mxu0 0.0
    %376 = vmatprep.subr.mxu0 0.0
    %377 = vmatpush1.msra.mxu0 0.0
    %378 = vmatprep.subr.mxu0 0.0
    %379 = vmatpush1.msra.mxu0 0.0
    %380 = vmatprep.subr.mxu0 0.0
    %381 = vmatpush1.msra.mxu0 0.0
    %382 = vmatprep.subr.mxu0 0.0
    %383 = vmatpush1.msra.mxu0 0.0
    %384 = vmatprep.subr.mxu0 0.0
    %385 = vmatpush1.msra.mxu0 0.0
    %386 = vmatprep.subr.mxu0 0.0
    %387 = vmatpush1.msra.mxu0 0.0
    %388 = vmatprep.subr.mxu0 0.0
    %389 = vmatpush1.msra.mxu0 0.0
    %390 = vmatprep.subr.mxu0 0.0
    %391 = vmatpush1.msra.mxu0 0.0
    %392 = vmatprep.subr.mxu0 0.0
    %393 = vmatpush1.msra.mxu0 0.0
    %394 = vmatprep.subr.mxu0 0.0
    %395 = vmatpush1.msra.mxu0 0.0
    %396 = vmatprep.subr.mxu0 0.0
    %397 = vmatpush1.msra.mxu0 0.0
    %398 = vmatprep.subr.mxu0 0.0
    %399 = vmatpush1.msra.mxu0 0.0
    %400 = vmatprep.subr.mxu0 0.0
    %401 = vmatpush1.msra.mxu0 0.0
    %402 = vmatprep.subr.mxu0 0.0
    %403 = vmatpush1.msra.mxu0 0.0
    %404 = vmatprep.subr.mxu0 0.0
    %405 = vmatpush1.msra.mxu0 0.0
    %406 = vmatprep.subr.mxu0 0.0
    %407 = vmatpush1.msra.mxu0 0.0
    %408 = vmatprep.subr.mxu0 0.0
    %409 = vmatpush1.msra.mxu0 0.0
    %410 = vmatprep.subr.mxu0 0.0
    %411 = vmatpush1.msra.mxu0 0.0
    %412 = vmatprep.subr.mxu0 0.0
    %413 = vmatpush1.msra.mxu0 0.0
    %414 = vmatprep.subr.mxu0 0.0
    %415 = vmatpush1.msra.mxu0 0.0
    %416 = vmatprep.subr.mxu0 0.0
    %417 = vmatpush1.msra.mxu0 0.0
    %418 = vmatprep.subr.mxu0 0.0
    %419 = vmatpush1.msra.mxu0 0.0
    %420 = vmatprep.subr.mxu0 0.0
    %421 = vmatpush1.msra.mxu0 0.0
    %422 = vmatprep.subr.mxu0 0.0
    %423 = vmatpush1.msra.mxu0 0.0
    %424 = vmatprep.subr.mxu0 0.0
    %425 = vmatpush1.msra.mxu0 0.0
    %426 = vmatprep.subr.mxu0 0.0
    %427 = vmatpush1.msra.mxu0 0.0
    %428 = vmatprep.subr.mxu0 0.0
    %429 = vmatpush1.msra.mxu0 0.0
    %430 = vmatprep.subr.mxu0 0.0
    %431 = vmatpush1.msra.mxu0 0.0
    %432 = vmatprep.subr.mxu0 0.0
    %433 = vmatpush1.msra.mxu0 0.0
    %434 = vmatprep.subr.mxu0 0.0
    %435 = vmatpush1.msra.mxu0 0.0
    %436 = vmatprep.mubr.f32.mxu0 0.0
    %437 = vmatmul.mubr.f32.gmra.mrb[0].mxu0 %v121
    %v438 = vpop.f32.mrb[0].mxu0
    %v439 = vadd.f32 0.0, %v438
    %v440 = vpop.f32.mrb[0].mxu0
    %441 = vmatprep.mubr.f32.mxu0 0.0
    %442 = vmatmul.mubr.f32.gmra.mrb[0].mxu0 %v124
    %v443 = vpop.f32.mrb[0].mxu0
    %v444 = vadd.f32 0.0, %v443
    %v445 = vpop.f32.mrb[0].mxu0
    %446 = vdwg.mxu0
    %v447 = vadd.f32 %v363, %v439
    %v448 = vadd.f32 %v368, %v444
    %v449 = vld [vmem:[%s7] sm:$0x1]
    %v451 = vlaneseq
    %v452 = vshrl.u32 %v451, 7
    %v453 = vsub.s32 0, %v452
    %v454 = vrot.slane %v449, %v453
    %v456 = vadd.f32 %v447, %v454
    %v457 = vadd.f32 %v448, %v454
    %vm458 = vcmask 261120
    %459 = vst.msk [vmem:[#allocation2] sm:$0xff] %vm458, %v456
    %460 = vst.msk [vmem:[#allocation2 + $0x8] sm:$0xff] %vm458, %v457
    // Predicated region
    $region34: #{tpu_custom_call.1} parent=1 // pred_check
      _
    $region35: #{tpu_custom_call.1} parent=1 // pred_check_branch
      %462 = sbr.rel (0) target = $region37
    $region36: #{tpu_custom_call.1} parent=1 // pred_region
      %s464 = ssub.s32 256, 256
      %465 = vsyncadd [#allocation3], %s464
      %s466 = sshll.u32 [#allocation2], 4
      %s467 = int_to_ptr.vmem [resolvable:$true] %s466
      %472 = dma.vmem_to_hbm [thread:$0]  %s467, 256, %s8, [#allocation3], 128, 128, 8
    $region37: #{tpu_custom_call.1} parent=1 // pred_fallthru
      _
    // Predicated region
    $region38: #{tpu_custom_call.1} parent=1 // pred_check
      _
    $region39: #{tpu_custom_call.1} parent=1 // pred_check_branch
      %474 = sbr.rel (0) target = $region41
    $region40: #{tpu_custom_call.1} parent=1 // pred_region
      %475 = dma.done [#allocation3], 256
    $region41: #{tpu_custom_call.1} parent=1 // pred_fallthru
      _
    %476 = vsyncpa [#allocation3], 1

</llo_original>
